<compile_context>
chip_gen: v6e
topology: v6e:2x2x1
jax: 0.10.0
libtpu: 0.0.40
codegen_flags: <defaults>
</compile_context>

<pallas_src>
import jax
import jax.numpy as jnp
from jax.experimental import pallas as pl
from jax.experimental.pallas import tpu as pltpu


# ----------------------------- helpers --------------------------------------

_DEFAULT_MAX_TB = 2048  # lane-axis batch tile upper bound (multiple of 128)


def _dot_t(a, b):
    """(M, K) x (N, K) -> (M, N), contracting both operands on the trailing K.

    Keeps the batch (N) on the output lane axis with no explicit transpose of
    the (N, K) tile: the MXU handles the implicit rhs transpose.  f32 accumulate.
    """
    return jax.lax.dot_general(
        a, b,
        dimension_numbers=(((1,), (1,)), ((), ())),
        preferred_element_type=jnp.float32,
    )


def _pick_batch_tile(B, block_b=None):
    """Pick a batch tile (multiple of 128) and the padded batch size.

    Large tiles amortize the ~0.35us/step grid overhead; when the batch is
    large enough we force >= 2 grid steps so the parallel grid axis shards
    across both v7x TensorCores.  VMEM is never the constraint here (an
    (tb, 32) f32 tile is only tb*128 bytes).
    """
    if block_b is not None:
        tb = int(block_b)
        assert tb % 128 == 0, "block_b must be a multiple of 128"
    else:
        tb = min(_DEFAULT_MAX_TB, pl.next_power_of_2(max(int(B), 128)))
        if B > 128 and pl.cdiv(B, tb) < 2:
            tb = max(128, tb // 2)
    b_pad = pl.cdiv(B, tb) * tb
    return tb, b_pad


# ----------------------------- kernels --------------------------------------

def _lasso_linear_kernel(x_ref, w_ref, o_ref):
    # x_ref: (tb, F) batch-major tile, w_ref: (1, F), o_ref: (1, tb) lane-dense.
    o_ref[...] = _dot_t(w_ref[...], x_ref[...]).astype(o_ref.dtype)


def _lasso_nonlinear_kernel(x_ref, w1g_ref, b1_ref, w2_ref, o_ref):
    # x_ref: (tb, F), w1g_ref: (H, F) with CancelOut gate pre-folded,
    # b1_ref: (H, 1), w2_ref: (H, 1), o_ref: (1, tb) lane-dense.
    h = _dot_t(w1g_ref[...], x_ref[...])              # (H, tb): MXU, batch on lanes
    h = jnp.maximum(h + b1_ref[...], 0.0)             # bias + ReLU (VPU, f32)
    # Dropout(p=0.5): identity in eval mode.
    # Width-1 output layer: VPU multiply + sublane reduce (XLU); no MXU round-trip.
    o_ref[...] = jnp.sum(h * w2_ref[...], axis=0, keepdims=True).astype(o_ref.dtype)


# ----------------------------- wrappers -------------------------------------

def lasso_nn_linear(x, w, *, block_b=None, compute_dtype=None):
    """is_linear=True path: y = x @ w.T with w: (1, F) (PyTorch layout), no bias."""
    B, F = x.shape
    assert w.shape == (1, F)
    tb, b_pad = _pick_batch_tile(B, block_b)
    if b_pad != B:
        x = jnp.pad(x, ((0, b_pad - B), (0, 0)))
    if compute_dtype is not None:  # optional bf16 HBM stream; accumulate stays f32
        x = x.astype(compute_dtype)
        w = w.astype(compute_dtype)
    itemsize = jnp.dtype(x.dtype).itemsize
    cost = pl.CostEstimate(
        flops=2 * F * b_pad,
        transcendentals=0,
        bytes_accessed=b_pad * F * itemsize + F * itemsize + b_pad * 4,
    )
    out = pl.pallas_call(
        _lasso_linear_kernel,
        out_shape=jax.ShapeDtypeStruct((1, b_pad), jnp.float32),
        grid_spec=pl.GridSpec(
            grid=(b_pad // tb,),
            in_specs=[
                pl.BlockSpec((tb, F), lambda i: (i, 0)),   # native layout, no HBM transpose
                pl.BlockSpec((1, F), lambda i: (0, 0)),    # constant block: fetched once
            ],
            out_specs=pl.BlockSpec((1, tb), lambda i: (0, i)),  # lane-dense output row
        ),
        compiler_params=pltpu.CompilerParams(
            dimension_semantics=("parallel",),
        ),
        cost_estimate=cost,
    )(x, w)
    return out[0, :B].reshape(B, 1)


def lasso_nn_nonlinear(x, cancel_w, w1, b1, w2, *, block_b=None, compute_dtype=None):
    """is_linear=False path (eval-mode Dropout == identity).

    PyTorch-native parameter layouts:
      cancel_w: (F,)   CancelOut.weights
      w1:       (H, F) nn.Linear(F, H).weight
      b1:       (H,)   nn.Linear(F, H).bias
      w2:       (1, H) nn.Linear(H, 1, bias=False).weight
    """
    B, F = x.shape
    H, Fw = w1.shape
    assert Fw == F and cancel_w.shape == (F,) and b1.shape == (H,) and w2.shape == (1, H)
    tb, b_pad = _pick_batch_tile(B, block_b)
    if b_pad != B:
        x = jnp.pad(x, ((0, b_pad - B), (0, 0)))
    # Fold the CancelOut gate into w1 (layer is linear in gated x):
    #   (x * g) @ w1^T == x @ (w1 * g^T)^T.  Removes the per-tile sigmoid and
    # the per-tile (F, tb) multiply from the kernel entirely.
    gate = jax.nn.sigmoid(cancel_w.astype(jnp.float32))
    w1g = (w1.astype(jnp.float32) * gate[None, :])
    b1c = b1.reshape(H, 1).astype(jnp.float32)
    w2c = w2.reshape(H, 1).astype(jnp.float32)   # (1, H) row -> (H, 1) column
    if compute_dtype is not None:  # optional bf16 HBM stream; accumulate stays f32
        x = x.astype(compute_dtype)
        w1g = w1g.astype(compute_dtype)
    itemsize = jnp.dtype(x.dtype).itemsize
    cost = pl.CostEstimate(
        flops=(2 * H * F + 4 * H) * b_pad,
        transcendentals=0,
        bytes_accessed=b_pad * F * itemsize + (H * F + 2 * H) * 4 + b_pad * 4,
    )
    out = pl.pallas_call(
        _lasso_nonlinear_kernel,
        out_shape=jax.ShapeDtypeStruct((1, b_pad), jnp.float32),
        grid_spec=pl.GridSpec(
            grid=(b_pad // tb,),
            in_specs=[
                pl.BlockSpec((tb, F), lambda i: (i, 0)),   # native layout, no HBM transpose
                pl.BlockSpec((H, F), lambda i: (0, 0)),    # gated weights, VMEM-resident
                pl.BlockSpec((H, 1), lambda i: (0, 0)),
                pl.BlockSpec((H, 1), lambda i: (0, 0)),
            ],
            out_specs=pl.BlockSpec((1, tb), lambda i: (0, i)),  # lane-dense output row
        ),
        compiler_params=pltpu.CompilerParams(
            dimension_semantics=("parallel",),
        ),
        cost_estimate=cost,
    )(x, w1g, b1c, w2c)
    return out[0, :B].reshape(B, 1)


# ----------------------------- reference ------------------------------------

def ref_linear(x, w):
    return x @ w.T


def ref_nonlinear(x, cancel_w, w1, b1, w2):
    xg = x * jax.nn.sigmoid(cancel_w)[None, :]
    h = jnp.maximum(xg @ w1.T + b1[None, :], 0.0)
    return h @ w2.T


# ----------------------------- main -----------------------------------------

if __name__ == "__main__":
    B, F, H = 8, 32, 16
    key = jax.random.PRNGKey(0)
    kx, kw, kw1, kb1, kw2 = jax.random.split(key, 5)

    x = jax.random.normal(kx, (B, F), dtype=jnp.float32)

    # Deterministic parameter init (PyTorch-Linear-style uniform bounds, native layouts).
    bound_f = 1.0 / jnp.sqrt(jnp.float32(F))
    bound_h = 1.0 / jnp.sqrt(jnp.float32(H))
    w_lin = jax.random.uniform(kw, (1, F), jnp.float32, -bound_f, bound_f)
    w1 = jax.random.uniform(kw1, (H, F), jnp.float32, -bound_f, bound_f)
    b1 = jax.random.uniform(kb1, (H,), jnp.float32, -bound_f, bound_f)
    w2 = jax.random.uniform(kw2, (1, H), jnp.float32, -bound_h, bound_h)
    # CancelOut: weights = zeros(features) + 4
    cancel_w = jnp.zeros((F,), dtype=jnp.float32) + 4.0

    # is_linear=True path
    y_lin = jax.block_until_ready(lasso_nn_linear(x, w_lin))
    y_lin_ref = ref_linear(x, w_lin)

    # is_linear=False path
    y_nl = jax.block_until_ready(lasso_nn_nonlinear(x, cancel_w, w1, b1, w2))
    y_nl_ref = ref_nonlinear(x, cancel_w, w1, b1, w2)

    assert y_lin.shape == (B, 1) and y_nl.shape == (B, 1)
    assert jnp.allclose(y_lin, y_lin_ref, atol=1e-5, rtol=1e-5)
    assert jnp.allclose(y_nl, y_nl_ref, atol=1e-5, rtol=1e-5)

    print("KERNEL_OK")
</pallas_src>

<mosaic_0001>
module attributes {stable_mosaic.version = 11 : i64} {
  func.func @_lasso_linear_kernel(%arg0: i32, %arg1: memref<128x32xf32, #tpu.memory_space<vmem>>, %arg2: memref<1x32xf32, #tpu.memory_space<vmem>>, %arg3: memref<1x128xf32, #tpu.memory_space<vmem>>) attributes {dimension_semantics = [#tpu.dimension_semantics<parallel>], iteration_bounds = array<i64: 1>, scalar_prefetch = 0 : i64, scratch_operands = 0 : i64, tpu.core_type = #tpu.core_type<tc>, window_params = [{transform_indices = @transform_0, window_bounds = array<i64: 128, 32>}, {pipeline_mode = #tpu.pipeline_mode<synchronous>, transform_indices = @transform_1, window_bounds = array<i64: 1, 32>}, {transform_indices = @transform_2, window_bounds = array<i64: 1, 128>}]} {
    %c0 = arith.constant 0 : index
    %c0_0 = arith.constant 0 : index
    %0 = vector.load %arg2[%c0, %c0_0] : memref<1x32xf32, #tpu.memory_space<vmem>>, vector<1x32xf32>
    %c0_1 = arith.constant 0 : index
    %c0_2 = arith.constant 0 : index
    %1 = vector.load %arg1[%c0_1, %c0_2] : memref<128x32xf32, #tpu.memory_space<vmem>>, vector<128x32xf32>
    %cst = arith.constant dense<0.000000e+00> : vector<1x128xf32>
    %2 = tpu.matmul %0, %1, %cst {dimension_numbers = #tpu.dot_dimension_numbers<[1], [1], [0], [0], [0, 0, 1, 0], [], []>} : vector<1x32xf32>, vector<128x32xf32>, vector<1x128xf32> -> vector<1x128xf32>
    %c0_3 = arith.constant 0 : index
    %c0_4 = arith.constant 0 : index
    %3 = vector.load %arg3[%c0_3, %c0_4] : memref<1x128xf32, #tpu.memory_space<vmem>>, vector<1x128xf32>
    tpu.vector_store %arg3[%c0_3, %c0_4], %2 {strides = array<i32>} : memref<1x128xf32, #tpu.memory_space<vmem>>, vector<1x128xf32>,
    return
  }
  func.func @transform_0(%arg0: i32) -> (i32, i32) {
    %c0_i32 = arith.constant 0 : i32
    %c0_i32_0 = arith.constant 0 : i32
    return %arg0, %c0_i32 : i32, i32
  }
  func.func @transform_1(%arg0: i32) -> (i32, i32) {
    %c0_i32 = arith.constant 0 : i32
    %c0_i32_0 = arith.constant 0 : i32
    %c0_i32_1 = arith.constant 0 : i32
    return %c0_i32, %c0_i32_0 : i32, i32
  }
  func.func @transform_2(%arg0: i32) -> (i32, i32) {
    %c0_i32 = arith.constant 0 : i32
    %c0_i32_0 = arith.constant 0 : i32
    return %c0_i32, %arg0 : i32, i32
  }
}

</mosaic_0001>

<llo_original>
// kernel: tpu_custom_call.1
$region0: #{tpu_custom_call.1}
  #allocation0 [shape = 'u32[]', space=smem, size = 0x4, offset = 0x4, fixed_abs, tag = 'smem constant byte address 0x4 - core index']
  #allocation1 [shape = 'u32[144,128]{1,0:T(1,128)}', space=vmem, size = 0x12000, scoped, tag = 'internal scratch']
  %s0 = inlined_call_operand.vmem [shape: f32[128,32], index: 0, kind: input, shape index: {}]
  %s1 = inlined_call_operand.vmem [shape: f32[1,32], index: 1, kind: input, shape index: {}]
  %s2 = inlined_call_operand.hbm [shape: f32[1,128], index: 2, kind: output, shape index: {}]
  %s3 = sld [smem:[#allocation0]]
  $region18: #{tpu_custom_call.1} parent=0
    _
  %s5 = ssub.s32 1, %s3
  %s6 = scalar_select 0, %s5, %s3
  $region1: #{tpu_custom_call.1} parent=0
    #allocation2 [shape = 'u8[512]{0}', space=vmem, size = 0x400, scoped, tag = 'output window, operand 0, single buffered']
    #allocation3 [shape = 's32[1]{0}', space=sflag, size = 0x4, scoped, tag = 'scoped memory for tpu_custom_call.1']
    %7 = vsyncpa [#allocation3], 0
    // Predicated region
    $region2: #{tpu_custom_call.1} parent=1 // pred_check
      _
    $region3: #{tpu_custom_call.1} parent=1 // pred_check_branch
      %9 = sbr.rel (0) target = $region5
    $region4: #{tpu_custom_call.1} parent=1 // pred_region
      _
    $region5: #{tpu_custom_call.1} parent=1 // pred_fallthru
      _
    // Predicated region
    $region6: #{tpu_custom_call.1} parent=1 // pred_check
      _
    $region7: #{tpu_custom_call.1} parent=1 // pred_check_branch
      %11 = sbr.rel (0) target = $region9
    $region8: #{tpu_custom_call.1} parent=1 // pred_region
      _
    $region9: #{tpu_custom_call.1} parent=1 // pred_fallthru
      _
    %v12 = vld [vmem:[%s1] sm:$0x1]
    %v13 = vld [vmem:[%s0] sm:$0xff]
    %v14 = vld [vmem:[%s0 + $0x8] sm:$0xff]
    %v15 = vld [vmem:[%s0 + $0x10] sm:$0xff]
    %v16 = vld [vmem:[%s0 + $0x18] sm:$0xff]
    %v17 = vld [vmem:[%s0 + $0x20] sm:$0xff]
    %v18 = vld [vmem:[%s0 + $0x28] sm:$0xff]
    %v19 = vld [vmem:[%s0 + $0x30] sm:$0xff]
    %v20 = vld [vmem:[%s0 + $0x38] sm:$0xff]
    %v21 = vld [vmem:[%s0 + $0x40] sm:$0xff]
    %v22 = vld [vmem:[%s0 + $0x48] sm:$0xff]
    %v23 = vld [vmem:[%s0 + $0x50] sm:$0xff]
    %v24 = vld [vmem:[%s0 + $0x58] sm:$0xff]
    %v25 = vld [vmem:[%s0 + $0x60] sm:$0xff]
    %v26 = vld [vmem:[%s0 + $0x68] sm:$0xff]
    %v27 = vld [vmem:[%s0 + $0x70] sm:$0xff]
    %v28 = vld [vmem:[%s0 + $0x78] sm:$0xff]
    %vm29 = vcmask 261120
    %v31 = vsel %vm29, %v12, 0
    %v34 = vsel %vm29, %v13, 0
    %v37 = vsel %vm29, %v14, 0
    %v40 = vsel %vm29, %v15, 0
    %v43 = vsel %vm29, %v16, 0
    %v46 = vsel %vm29, %v17, 0
    %v49 = vsel %vm29, %v18, 0
    %v52 = vsel %vm29, %v19, 0
    %v55 = vsel %vm29, %v20, 0
    %v58 = vsel %vm29, %v21, 0
    %v61 = vsel %vm29, %v22, 0
    %v64 = vsel %vm29, %v23, 0
    %v67 = vsel %vm29, %v24, 0
    %v70 = vsel %vm29, %v25, 0
    %v73 = vsel %vm29, %v26, 0
    %v76 = vsel %vm29, %v27, 0
    %v79 = vsel %vm29, %v28, 0
    %81 = vmatprep.subr.mxu0 0.0
    %82 = vmatpush1.xpose.msra.mxu0 %v79
    %83 = vmatprep.subr.mxu0 0.0
    %84 = vmatpush1.xpose.msra.mxu0 %v76
    %85 = vmatprep.subr.mxu0 0.0
    %86 = vmatpush1.xpose.msra.mxu0 %v73
    %87 = vmatprep.subr.mxu0 0.0
    %88 = vmatpush1.xpose.msra.mxu0 %v70
    %89 = vmatprep.subr.mxu0 0.0
    %90 = vmatpush1.xpose.msra.mxu0 %v67
    %91 = vmatprep.subr.mxu0 0.0
    %92 = vmatpush1.xpose.msra.mxu0 %v64
    %93 = vmatprep.subr.mxu0 0.0
    %94 = vmatpush1.xpose.msra.mxu0 %v61
    %95 = vmatprep.subr.mxu0 0.0
    %96 = vmatpush1.xpose.msra.mxu0 %v58
    %97 = vmatprep.subr.mxu0 0.0
    %98 = vmatpush1.xpose.msra.mxu0 %v55
    %99 = vmatprep.subr.mxu0 0.0
    %100 = vmatpush1.xpose.msra.mxu0 %v52
    %101 = vmatprep.subr.mxu0 0.0
    %102 = vmatpush1.xpose.msra.mxu0 %v49
    %103 = vmatprep.subr.mxu0 0.0
    %104 = vmatpush1.xpose.msra.mxu0 %v46
    %105 = vmatprep.subr.mxu0 0.0
    %106 = vmatpush1.xpose.msra.mxu0 %v43
    %107 = vmatprep.subr.mxu0 0.0
    %108 = vmatpush1.xpose.msra.mxu0 %v40
    %109 = vmatprep.subr.mxu0 0.0
    %110 = vmatpush1.xpose.msra.mxu0 %v37
    %111 = vmatprep.subr.mxu0 0.0
    %112 = vmatpush1.xpose.msra.mxu0 %v34
    %113 = vmatprep.subr.mxu0 0.0
    %114 = vmatpush2.xpose.msra.mxu0 0.0
    %115 = vmatprep.subr.mxu0 0.0
    %116 = vmatpush2.xpose.msra.mxu0 0.0
    %117 = vmatprep.subr.mxu0 0.0
    %118 = vmatpush2.xpose.msra.mxu0 0.0
    %119 = vmatprep.subr.mxu0 0.0
    %120 = vmatpush2.xpose.msra.mxu0 0.0
    %121 = vmatprep.subr.mxu0 0.0
    %122 = vmatpush2.xpose.msra.mxu0 0.0
    %123 = vmatprep.subr.mxu0 0.0
    %124 = vmatpush2.xpose.msra.mxu0 0.0
    %125 = vmatprep.subr.mxu0 0.0
    %126 = vmatpush2.xpose.msra.mxu0 0.0
    %127 = vmatprep.subr.mxu0 0.0
    %128 = vmatpush2.xpose.msra.mxu0 0.0
    %129 = vmatprep.subr.mxu0 0.0
    %130 = vmatpush2.xpose.msra.mxu0 0.0
    %131 = vmatprep.subr.mxu0 0.0
    %132 = vmatpush2.xpose.msra.mxu0 0.0
    %133 = vmatprep.subr.mxu0 0.0
    %134 = vmatpush2.xpose.msra.mxu0 0.0
    %135 = vmatprep.subr.mxu0 0.0
    %136 = vmatpush2.xpose.msra.mxu0 0.0
    %137 = vmatprep.subr.mxu0 0.0
    %138 = vmatpush2.xpose.msra.mxu0 0.0
    %139 = vmatprep.subr.mxu0 0.0
    %140 = vmatpush2.xpose.msra.mxu0 0.0
    %141 = vmatprep.subr.mxu0 0.0
    %142 = vmatpush2.xpose.msra.mxu0 0.0
    %143 = vmatprep.subr.mxu0 0.0
    %144 = vmatpush2.xpose.msra.mxu0 0.0
    %145 = vmatprep.mubr.f32.mxu0 0.0
    %146 = vmatmul.mubr.f32.gmra.mxu0 %v31
    %v147 = vpop.f32.mrf.mxu0
    %v148 = vadd.f32 0.0, %v147
    %v149 = vpop.f32.mrf.mxu0
    %150 = vdwg.mxu0
    %151 = vst [vmem:[#allocation2] sm:$0x1] %v148
    // Predicated region
    $region10: #{tpu_custom_call.1} parent=1 // pred_check
      _
    $region11: #{tpu_custom_call.1} parent=1 // pred_check_branch
      %153 = sbr.rel (0) target = $region13
    $region12: #{tpu_custom_call.1} parent=1 // pred_region
      %s155 = ssub.s32 16, 16
      %156 = vsyncadd [#allocation3], %s155
      %s158 = sshll.u32 [#allocation2], 4
      %s159 = int_to_ptr.vmem [resolvable:$true] %s158
      %161 = dma.vmem_to_hbm [thread:$0]  %s159, 16, %s2, [#allocation3]
    $region13: #{tpu_custom_call.1} parent=1 // pred_fallthru
      _
    // Predicated region
    $region14: #{tpu_custom_call.1} parent=1 // pred_check
      _
    $region15: #{tpu_custom_call.1} parent=1 // pred_check_branch
      %163 = sbr.rel (0) target = $region17
    $region16: #{tpu_custom_call.1} parent=1 // pred_region
      %164 = dma.done [#allocation3], 16
    $region17: #{tpu_custom_call.1} parent=1 // pred_fallthru
      _
    %165 = vsyncpa [#allocation3], 1

</llo_original>
